<compile_context>
chip_gen: v7x
topology: tpu7x:2x2x1
jax: 0.10.0
libtpu: 0.0.40
codegen_flags: <defaults>
</compile_context>

<pallas_src>
import jax
import jax.numpy as jnp
from jax.experimental import pallas as pl
from jax.experimental.pallas import tpu as pltpu


def _round_up(x, m):
    return ((x + m - 1) // m) * m


def _gaussian_kernel(x_ref, w_ref, b_ref, mu_ref, var_ref):
    z = mu_ref.shape[-1]
    # One fused MXU matmul: [tb, D] @ [D, 2Z] -> [tb, 2Z], f32 accumulate.
    acc = jnp.dot(x_ref[...], w_ref[...], preferred_element_type=jnp.float32)
    acc = acc + b_ref[...].astype(jnp.float32)
    # Split mu/logvar in-register (cheap lane slice) so the HBM writeback is
    # exactly B*2Z useful elements -- no padded slab, no wrapper slicing.
    mu_ref[...] = acc[:, :z].astype(mu_ref.dtype)
    var_ref[...] = acc[:, z:].astype(var_ref.dtype)


def fuse_gaussian_params(w_mu, b_mu, w_var, b_var):
    """Fuse the two nn.Linear parameter sets ONCE, outside the forward pass.

    Store and reuse the returned (w, b); doing this per forward call would
    re-read + rewrite the full weight in HBM before the kernel even starts.
    w_*: [in_dim, z_dim] (already transposed vs nn.Linear), b_*: [z_dim].
    """
    w = jnp.concatenate([w_mu, w_var], axis=1)          # [D, 2Z]
    b = jnp.concatenate([b_mu, b_var]).reshape(1, -1)   # [1, 2Z]
    # Optional: cast w (and x at call time) to bfloat16 here if the model
    # tolerates it -- halves resident weight VMEM and HBM traffic.
    return w, b


def _vmem_budget_bytes():
    """Scoped-VMEM budget with headroom, valid across v5e/v6e/v7x."""
    try:
        cap = int(pltpu.get_tpu_info().vmem_capacity_bytes)
    except Exception:
        cap = 64 * 1024 * 1024   # v7x-safe fallback
    return max(cap // 2, 16 * 1024 * 1024)


def gaussian_forward(x, w, b, *, tile_b=1024):
    """x: [B, in_dim]; w: [in_dim, 2*z_dim] fused; b: [1, 2*z_dim] fused.

    Returns (mu, logvar), each [B, z_dim].
    """
    B, D = x.shape
    N = w.shape[1]
    Z = N // 2
    itemsize = jnp.dtype(x.dtype).itemsize
    w_itemsize = jnp.dtype(w.dtype).itemsize

    # ---- batch tiling --------------------------------------------------------
    # Rows padded to the 8-row sublane tile (unmasked sublane stores); aim for
    # >=2 batch tiles so the "parallel" axis feeds both TensorCores on v7x.
    sub = 8
    budget = _vmem_budget_bytes()
    tb = max(sub, min(_round_up(tile_b, sub), _round_up(pl.cdiv(B, 2), sub)))

    Dp = _round_up(D, 128)
    Zp = _round_up(Z, 128)
    Np = _round_up(N, 128)

    def vmem_needed(tb_):
        # double-buffered x / mu / logvar tiles + single-buffered fused weight & bias
        return (2 * tb_ * Dp * itemsize
                + 2 * 2 * tb_ * Zp * itemsize
                + (Dp * Np + Np) * w_itemsize)

    while vmem_needed(tb) > budget and tb > sub:
        tb = max(_round_up(tb // 2, sub), sub)

    Bp = _round_up(B, tb)
    if Bp != B:
        x = jnp.pad(x, ((0, Bp - B), (0, 0)))
    grid_b = Bp // tb

    # TODO(synk): for very large in_dim (fused weight approaching the VMEM
    # budget even single-buffered), add a K grid axis ("arbitrary", last) with
    # an f32 accumulator scratch + pl.when init/finalize.

    cost = pl.CostEstimate(
        flops=2 * Bp * D * N,
        transcendentals=0,
        bytes_accessed=Bp * D * itemsize + (D * N + N) * w_itemsize + Bp * N * itemsize,
    )

    cparams = pltpu.CompilerParams(
        dimension_semantics=("parallel",),        # batch tiles across TCs (v7x)
        vmem_limit_bytes=int(budget),             # raise v5e's 16 MiB default
    )

    out_shape = (jax.ShapeDtypeStruct((Bp, Z), x.dtype),
                 jax.ShapeDtypeStruct((Bp, Z), x.dtype))

    def run(single_buffer_params):
        param_kw = {"pipeline_mode": pl.Buffered(1)} if single_buffer_params else {}
        in_specs = [
            pl.BlockSpec((tb, D), lambda i: (i, 0)),              # x streams over the grid
            pl.BlockSpec((D, N), lambda i: (0, 0), **param_kw),   # fused weight: resident
            pl.BlockSpec((1, N), lambda i: (0, 0), **param_kw),   # fused bias:   resident
        ]
        out_specs = (
            pl.BlockSpec((tb, Z), lambda i: (i, 0)),              # mu
            pl.BlockSpec((tb, Z), lambda i: (i, 0)),              # logvar
        )
        return pl.pallas_call(
            _gaussian_kernel,
            out_shape=out_shape,
            grid=(grid_b,),
            in_specs=in_specs,
            out_specs=out_specs,
            compiler_params=cparams,
            cost_estimate=cost,
        )(x, w, b)

    try:
        mu, logvar = run(True)
    except Exception:
        # pipeline_mode=pl.Buffered(1) unsupported in this build: fall back to
        # default double-buffering (only the VMEM footprint differs; the
        # constant index_map already avoids re-DMA of the weight).
        mu, logvar = run(False)

    if Bp != B:
        mu, logvar = mu[:B], logvar[:B]
    return mu, logvar


def init_gaussian_params(key, in_dim, z_dim, dtype=jnp.float32):
    """Deterministic init mimicking nn.Linear (uniform in +/- 1/sqrt(in_dim))."""
    k1, k2, k3, k4 = jax.random.split(key, 4)
    bound = 1.0 / jnp.sqrt(jnp.float32(in_dim))
    w_mu = jax.random.uniform(k1, (in_dim, z_dim), dtype, -bound, bound)
    b_mu = jax.random.uniform(k2, (z_dim,), dtype, -bound, bound)
    w_var = jax.random.uniform(k3, (in_dim, z_dim), dtype, -bound, bound)
    b_var = jax.random.uniform(k4, (z_dim,), dtype, -bound, bound)
    return w_mu, b_mu, w_var, b_var


if __name__ == "__main__":
    key = jax.random.PRNGKey(0)
    kx, kp, kx2 = jax.random.split(key, 3)

    # Small shapes consistent with the module.
    batch, in_dim, z_dim = 8, 32, 16
    x = jax.random.normal(kx, (batch, in_dim), jnp.float32)
    w_mu, b_mu, w_var, b_var = init_gaussian_params(kp, in_dim, z_dim)

    # Fuse the parameters ONCE (hoisted out of the forward pass).
    w, b = fuse_gaussian_params(w_mu, b_mu, w_var, b_var)

    # 1) Tiny single-tile path.
    mu, logvar = gaussian_forward(x, w, b)
    jax.block_until_ready((mu, logvar))
    mu_ref = x @ w_mu + b_mu
    lv_ref = x @ w_var + b_var
    assert mu.shape == (batch, z_dim) and logvar.shape == (batch, z_dim)
    assert jnp.allclose(mu, mu_ref, atol=1e-5), "mu mismatch"
    assert jnp.allclose(logvar, lv_ref, atol=1e-5), "logvar mismatch"

    # 2) Tiled multi-block path (ragged batch -> padding + >=2 grid tiles).
    batch2 = 520
    x2 = jax.random.normal(kx2, (batch2, in_dim), jnp.float32)
    mu2, lv2 = gaussian_forward(x2, w, b, tile_b=1024)
    jax.block_until_ready((mu2, lv2))
    assert mu2.shape == (batch2, z_dim) and lv2.shape == (batch2, z_dim)
    assert jnp.allclose(mu2, x2 @ w_mu + b_mu, atol=1e-4), "tiled mu mismatch"
    assert jnp.allclose(lv2, x2 @ w_var + b_var, atol=1e-4), "tiled logvar mismatch"

    print("KERNEL_OK")
</pallas_src>

<mosaic_0001>
module attributes {stable_mosaic.version = 11 : i64} {
  func.func @_gaussian_kernel(%arg0: i32, %arg1: memref<8x32xf32, #tpu.memory_space<vmem>>, %arg2: memref<32x32xf32, #tpu.memory_space<vmem>>, %arg3: memref<1x32xf32, #tpu.memory_space<vmem>>, %arg4: memref<8x16xf32, #tpu.memory_space<vmem>>, %arg5: memref<8x16xf32, #tpu.memory_space<vmem>>) attributes {dimension_semantics = [#tpu.dimension_semantics<parallel>], iteration_bounds = array<i64: 1>, scalar_prefetch = 0 : i64, scratch_operands = 0 : i64, tpu.core_type = #tpu.core_type<tc>, window_params = [{transform_indices = @transform_0, window_bounds = array<i64: 8, 32>}, {pipeline_mode = #tpu.pipeline_mode<synchronous>, transform_indices = @transform_1, window_bounds = array<i64: 32, 32>}, {pipeline_mode = #tpu.pipeline_mode<synchronous>, transform_indices = @transform_2, window_bounds = array<i64: 1, 32>}, {transform_indices = @transform_3, window_bounds = array<i64: 8, 16>}, {transform_indices = @transform_4, window_bounds = array<i64: 8, 16>}]} {
    %c0 = arith.constant 0 : index
    %c0_0 = arith.constant 0 : index
    %0 = vector.load %arg1[%c0, %c0_0] : memref<8x32xf32, #tpu.memory_space<vmem>>, vector<8x32xf32>
    %c0_1 = arith.constant 0 : index
    %c0_2 = arith.constant 0 : index
    %1 = vector.load %arg2[%c0_1, %c0_2] : memref<32x32xf32, #tpu.memory_space<vmem>>, vector<32x32xf32>
    %cst = arith.constant dense<0.000000e+00> : vector<8x32xf32>
    %2 = tpu.matmul %0, %1, %cst {dimension_numbers = #tpu.dot_dimension_numbers<[1], [0], [0], [1], [0, 0, 1, 1], [], []>} : vector<8x32xf32>, vector<32x32xf32>, vector<8x32xf32> -> vector<8x32xf32>
    %c0_3 = arith.constant 0 : index
    %c0_4 = arith.constant 0 : index
    %3 = vector.load %arg3[%c0_3, %c0_4] : memref<1x32xf32, #tpu.memory_space<vmem>>, vector<1x32xf32>
    %4 = vector.broadcast %3 : vector<1x32xf32> to vector<8x32xf32>
    %5 = arith.addf %2, %4 : vector<8x32xf32>
    %6 = vector.extract_strided_slice %5 {offsets = [0, 0], sizes = [8, 16], strides = [1, 1]} : vector<8x32xf32> to vector<8x16xf32>
    %c0_5 = arith.constant 0 : index
    %c0_6 = arith.constant 0 : index
    %7 = vector.load %arg4[%c0_5, %c0_6] : memref<8x16xf32, #tpu.memory_space<vmem>>, vector<8x16xf32>
    tpu.vector_store %arg4[%c0_5, %c0_6], %6 {strides = array<i32>} : memref<8x16xf32, #tpu.memory_space<vmem>>, vector<8x16xf32>,
    %8 = vector.extract_strided_slice %5 {offsets = [0, 16], sizes = [8, 16], strides = [1, 1]} : vector<8x32xf32> to vector<8x16xf32>
    %c0_7 = arith.constant 0 : index
    %c0_8 = arith.constant 0 : index
    %9 = vector.load %arg5[%c0_7, %c0_8] : memref<8x16xf32, #tpu.memory_space<vmem>>, vector<8x16xf32>
    tpu.vector_store %arg5[%c0_7, %c0_8], %8 {strides = array<i32>} : memref<8x16xf32, #tpu.memory_space<vmem>>, vector<8x16xf32>,
    return
  }
  func.func @transform_0(%arg0: i32) -> (i32, i32) {
    %c0_i32 = arith.constant 0 : i32
    %c0_i32_0 = arith.constant 0 : i32
    return %arg0, %c0_i32 : i32, i32
  }
  func.func @transform_1(%arg0: i32) -> (i32, i32) {
    %c0_i32 = arith.constant 0 : i32
    %c0_i32_0 = arith.constant 0 : i32
    %c0_i32_1 = arith.constant 0 : i32
    return %c0_i32, %c0_i32_0 : i32, i32
  }
  func.func @transform_2(%arg0: i32) -> (i32, i32) {
    %c0_i32 = arith.constant 0 : i32
    %c0_i32_0 = arith.constant 0 : i32
    %c0_i32_1 = arith.constant 0 : i32
    return %c0_i32, %c0_i32_0 : i32, i32
  }
  func.func @transform_3(%arg0: i32) -> (i32, i32) {
    %c0_i32 = arith.constant 0 : i32
    %c0_i32_0 = arith.constant 0 : i32
    return %arg0, %c0_i32 : i32, i32
  }
  func.func @transform_4(%arg0: i32) -> (i32, i32) {
    %c0_i32 = arith.constant 0 : i32
    %c0_i32_0 = arith.constant 0 : i32
    return %arg0, %c0_i32 : i32, i32
  }
}

module attributes {stable_mosaic.version = 11 : i64} {
  func.func @_gaussian_kernel(%arg0: i32, %arg1: memref<8x32xf32, #tpu.memory_space<vmem>>, %arg2: memref<32x32xf32, #tpu.memory_space<vmem>>, %arg3: memref<1x32xf32, #tpu.memory_space<vmem>>, %arg4: memref<8x16xf32, #tpu.memory_space<vmem>>, %arg5: memref<8x16xf32, #tpu.memory_space<vmem>>) attributes {dimension_semantics = [#tpu.dimension_semantics<parallel>], iteration_bounds = array<i64: 1>, scalar_prefetch = 0 : i64, scratch_operands = 0 : i64, tpu.core_type = #tpu.core_type<tc>, window_params = [{transform_indices = @transform_0, window_bounds = array<i64: 8, 32>}, {pipeline_mode = #tpu.pipeline_mode<synchronous>, transform_indices = @transform_1, window_bounds = array<i64: 32, 32>}, {pipeline_mode = #tpu.pipeline_mode<synchronous>, transform_indices = @transform_2, window_bounds = array<i64: 1, 32>}, {transform_indices = @transform_3, window_bounds = array<i64: 8, 16>}, {transform_indices = @transform_4, window_bounds = array<i64: 8, 16>}]} {
    %c0 = arith.constant 0 : index
    %c0_0 = arith.constant 0 : index
    %0 = vector.load %arg1[%c0, %c0_0] : memref<8x32xf32, #tpu.memory_space<vmem>>, vector<8x32xf32>
    %c0_1 = arith.constant 0 : index
    %c0_2 = arith.constant 0 : index
    %1 = vector.load %arg2[%c0_1, %c0_2] : memref<32x32xf32, #tpu.memory_space<vmem>>, vector<32x32xf32>
    %cst = arith.constant dense<0.000000e+00> : vector<8x32xf32>
    %2 = tpu.matmul %0, %1, %cst {dimension_numbers = #tpu.dot_dimension_numbers<[1], [0], [0], [1], [0, 0, 1, 1], [], []>} : vector<8x32xf32>, vector<32x32xf32>, vector<8x32xf32> -> vector<8x32xf32>
    %c0_3 = arith.constant 0 : index
    %c0_4 = arith.constant 0 : index
    %3 = vector.load %arg3[%c0_3, %c0_4] : memref<1x32xf32, #tpu.memory_space<vmem>>, vector<1x32xf32>
    %4 = vector.broadcast %3 : vector<1x32xf32> to vector<8x32xf32>
    %5 = arith.addf %2, %4 : vector<8x32xf32>
    %6 = vector.extract_strided_slice %5 {offsets = [0, 0], sizes = [8, 16], strides = [1, 1]} : vector<8x32xf32> to vector<8x16xf32>
    %c0_5 = arith.constant 0 : index
    %c0_6 = arith.constant 0 : index
    %7 = vector.load %arg4[%c0_5, %c0_6] : memref<8x16xf32, #tpu.memory_space<vmem>>, vector<8x16xf32>
    tpu.vector_store %arg4[%c0_5, %c0_6], %6 {strides = array<i32>} : memref<8x16xf32, #tpu.memory_space<vmem>>, vector<8x16xf32>,
    %8 = vector.extract_strided_slice %5 {offsets = [0, 16], sizes = [8, 16], strides = [1, 1]} : vector<8x32xf32> to vector<8x16xf32>
    %c0_7 = arith.constant 0 : index
    %c0_8 = arith.constant 0 : index
    %9 = vector.load %arg5[%c0_7, %c0_8] : memref<8x16xf32, #tpu.memory_space<vmem>>, vector<8x16xf32>
    tpu.vector_store %arg5[%c0_7, %c0_8], %8 {strides = array<i32>} : memref<8x16xf32, #tpu.memory_space<vmem>>, vector<8x16xf32>,
    return
  }
  func.func @transform_0(%arg0: i32) -> (i32, i32) {
    %c0_i32 = arith.constant 0 : i32
    %c0_i32_0 = arith.constant 0 : i32
    return %arg0, %c0_i32 : i32, i32
  }
  func.func @transform_1(%arg0: i32) -> (i32, i32) {
    %c0_i32 = arith.constant 0 : i32
    %c0_i32_0 = arith.constant 0 : i32
    %c0_i32_1 = arith.constant 0 : i32
    return %c0_i32, %c0_i32_0 : i32, i32
  }
  func.func @transform_2(%arg0: i32) -> (i32, i32) {
    %c0_i32 = arith.constant 0 : i32
    %c0_i32_0 = arith.constant 0 : i32
    %c0_i32_1 = arith.constant 0 : i32
    return %c0_i32, %c0_i32_0 : i32, i32
  }
  func.func @transform_3(%arg0: i32) -> (i32, i32) {
    %c0_i32 = arith.constant 0 : i32
    %c0_i32_0 = arith.constant 0 : i32
    return %arg0, %c0_i32 : i32, i32
  }
  func.func @transform_4(%arg0: i32) -> (i32, i32) {
    %c0_i32 = arith.constant 0 : i32
    %c0_i32_0 = arith.constant 0 : i32
    return %arg0, %c0_i32 : i32, i32
  }
}

</mosaic_0001>

<llo_original>
// kernel: tpu_custom_call.1
$region0: #{tpu_custom_call.1}
  #allocation0 [shape = 'u32[]', space=smem, size = 0x4, offset = 0x4, fixed_abs, tag = 'smem constant byte address 0x4 - core index']
  #allocation1 [shape = 'u32[144,128]{1,0:T(1,128)}', space=vmem, size = 0x12000, scoped, tag = 'internal scratch']
  %s0 = inlined_call_operand.hbm [shape: f32[8,32], index: 0, kind: input, shape index: {}]
  %s1 = inlined_call_operand.hbm [shape: f32[32,32], index: 1, kind: input, shape index: {}]
  %s2 = inlined_call_operand.vmem [shape: f32[1,32], index: 2, kind: input, shape index: {}]
  %s3 = inlined_call_operand.hbm [shape: f32[8,16], index: 3, kind: output, shape index: {0}]
  %s4 = inlined_call_operand.hbm [shape: f32[8,16], index: 4, kind: output, shape index: {1}]
  %5 = xla_tuple %s3, %s4
  %s6 = sld [smem:[#allocation0]]
  $region38: #{tpu_custom_call.1} parent=0
    _
  %s8 = ssub.s32 1, %s6
  %s9 = scalar_select 0, %s8, %s6
  $region1: #{tpu_custom_call.1} parent=0
    #allocation2 [shape = 'u8[4096]{0}', space=vmem, size = 0x1000, scoped, tag = 'input window, operand 0, single buffered']
    #allocation3 [shape = 's32[1]{0}', space=sflag, size = 0x4, scoped, tag = 'scoped memory for tpu_custom_call.1']
    #allocation4 [shape = 's32[1]{0}', space=sflag, size = 0x4, scoped, tag = 'scoped memory for tpu_custom_call.1']
    #allocation5 [shape = 'u8[16384]{0}', space=vmem, size = 0x4000, scoped, tag = 'input window, operand 1, single buffered']
    #allocation6 [shape = 's32[1]{0}', space=sflag, size = 0x4, scoped, tag = 'scoped memory for tpu_custom_call.1']
    #allocation7 [shape = 'u8[4096]{0}', space=vmem, size = 0x1000, scoped, tag = 'output window, operand 0, single buffered']
    #allocation8 [shape = 'u8[4096]{0}', space=vmem, size = 0x1000, scoped, tag = 'output window, operand 1, single buffered']
    #allocation9 [shape = 's32[1]{0}', space=sflag, size = 0x4, scoped, tag = 'scoped memory for tpu_custom_call.1']
    %10 = vsyncpa [#allocation3], 0
    %11 = vsyncpa [#allocation6], 0
    %12 = vsyncpa [#allocation4], 0
    %13 = vsyncpa [#allocation9], 0
    // Predicated region
    $region2: #{tpu_custom_call.1} parent=1 // pred_check
      _
    $region3: #{tpu_custom_call.1} parent=1 // pred_check_branch
      %15 = sbr.rel (0) target = $region5
    $region4: #{tpu_custom_call.1} parent=1 // pred_region
      %s17 = ssub.s32 128, 128
      %18 = vsyncadd [#allocation3], %s17
      %s20 = sshll.u32 [#allocation2], 4
      %s21 = int_to_ptr.vmem [resolvable:$true] %s20
      %23 = dma.hbm_to_vmem [thread:$0]  %s0, 128, %s21, [#allocation3]
    $region5: #{tpu_custom_call.1} parent=1 // pred_fallthru
      _
    // Predicated region
    $region6: #{tpu_custom_call.1} parent=1 // pred_check
      _
    $region7: #{tpu_custom_call.1} parent=1 // pred_check_branch
      %25 = sbr.rel (0) target = $region9
    $region8: #{tpu_custom_call.1} parent=1 // pred_region
      %s27 = ssub.s32 512, 512
      %28 = vsyncadd [#allocation6], %s27
      %s29 = sshll.u32 [#allocation5], 4
      %s30 = int_to_ptr.vmem [resolvable:$true] %s29
      %35 = dma.hbm_to_vmem [thread:$0]  %s1, 512, %s30, [#allocation6], 128, 128, 8
    $region9: #{tpu_custom_call.1} parent=1 // pred_fallthru
      _
    // Predicated region
    $region10: #{tpu_custom_call.1} parent=1 // pred_check
      _
    $region11: #{tpu_custom_call.1} parent=1 // pred_check_branch
      %37 = sbr.rel (0) target = $region13
    $region12: #{tpu_custom_call.1} parent=1 // pred_region
      _
    $region13: #{tpu_custom_call.1} parent=1 // pred_fallthru
      _
    // Predicated region
    $region14: #{tpu_custom_call.1} parent=1 // pred_check
      _
    $region15: #{tpu_custom_call.1} parent=1 // pred_check_branch
      %39 = sbr.rel (0) target = $region17
    $region16: #{tpu_custom_call.1} parent=1 // pred_region
      %40 = dma.done [#allocation3], 128
    $region17: #{tpu_custom_call.1} parent=1 // pred_fallthru
      _
    // Predicated region
    $region18: #{tpu_custom_call.1} parent=1 // pred_check
      _
    $region19: #{tpu_custom_call.1} parent=1 // pred_check_branch
      %42 = sbr.rel (0) target = $region21
    $region20: #{tpu_custom_call.1} parent=1 // pred_region
      %43 = dma.done [#allocation6], 512
    $region21: #{tpu_custom_call.1} parent=1 // pred_fallthru
      _
    %v44 = vld [vmem:[#allocation2] sm:$0xff]
    %v45 = vld [vmem:[#allocation5] sm:$0xff]
    %v46 = vld [vmem:[#allocation5 + $0x8] sm:$0xff]
    %v47 = vld [vmem:[#allocation5 + $0x10] sm:$0xff]
    %v48 = vld [vmem:[#allocation5 + $0x18] sm:$0xff]
    %v49 = vld [vmem:[%s2] sm:$0x1]
    %v51 = vlaneseq
    %v52 = vshrl.u32 %v51, 7
    %v53 = vsub.s32 0, %v52
    %v54 = vrot.slane %v49, %v53
    %vm56 = vcmask 261120
    %v58 = vsel %vm56, %v44, 0
    %60 = vmatprep.subr.mxu0 0.0
    %61 = vmatpush1.msra.mxu0 %v45
    %62 = vmatprep.subr.mxu0 0.0
    %63 = vmatpush1.msra.mxu0 %v46
    %64 = vmatprep.subr.mxu0 0.0
    %65 = vmatpush1.msra.mxu0 %v47
    %66 = vmatprep.subr.mxu0 0.0
    %67 = vmatpush1.msra.mxu0 %v48
    %68 = vmatprep.subr.mxu0 0.0
    %69 = vmatpush1.msra.mxu0 0.0
    %70 = vmatprep.subr.mxu0 0.0
    %71 = vmatpush1.msra.mxu0 0.0
    %72 = vmatprep.subr.mxu0 0.0
    %73 = vmatpush1.msra.mxu0 0.0
    %74 = vmatprep.subr.mxu0 0.0
    %75 = vmatpush1.msra.mxu0 0.0
    %76 = vmatprep.subr.mxu0 0.0
    %77 = vmatpush1.msra.mxu0 0.0
    %78 = vmatprep.subr.mxu0 0.0
    %79 = vmatpush1.msra.mxu0 0.0
    %80 = vmatprep.subr.mxu0 0.0
    %81 = vmatpush1.msra.mxu0 0.0
    %82 = vmatprep.subr.mxu0 0.0
    %83 = vmatpush1.msra.mxu0 0.0
    %84 = vmatprep.subr.mxu0 0.0
    %85 = vmatpush1.msra.mxu0 0.0
    %86 = vmatprep.subr.mxu0 0.0
    %87 = vmatpush1.msra.mxu0 0.0
    %88 = vmatprep.subr.mxu0 0.0
    %89 = vmatpush1.msra.mxu0 0.0
    %90 = vmatprep.subr.mxu0 0.0
    %91 = vmatpush1.msra.mxu0 0.0
    %92 = vmatprep.subr.mxu0 0.0
    %93 = vmatpush1.msra.mxu0 0.0
    %94 = vmatprep.subr.mxu0 0.0
    %95 = vmatpush1.msra.mxu0 0.0
    %96 = vmatprep.subr.mxu0 0.0
    %97 = vmatpush1.msra.mxu0 0.0
    %98 = vmatprep.subr.mxu0 0.0
    %99 = vmatpush1.msra.mxu0 0.0
    %100 = vmatprep.subr.mxu0 0.0
    %101 = vmatpush1.msra.mxu0 0.0
    %102 = vmatprep.subr.mxu0 0.0
    %103 = vmatpush1.msra.mxu0 0.0
    %104 = vmatprep.subr.mxu0 0.0
    %105 = vmatpush1.msra.mxu0 0.0
    %106 = vmatprep.subr.mxu0 0.0
    %107 = vmatpush1.msra.mxu0 0.0
    %108 = vmatprep.subr.mxu0 0.0
    %109 = vmatpush1.msra.mxu0 0.0
    %110 = vmatprep.subr.mxu0 0.0
    %111 = vmatpush1.msra.mxu0 0.0
    %112 = vmatprep.subr.mxu0 0.0
    %113 = vmatpush1.msra.mxu0 0.0
    %114 = vmatprep.subr.mxu0 0.0
    %115 = vmatpush1.msra.mxu0 0.0
    %116 = vmatprep.subr.mxu0 0.0
    %117 = vmatpush1.msra.mxu0 0.0
    %118 = vmatprep.subr.mxu0 0.0
    %119 = vmatpush1.msra.mxu0 0.0
    %120 = vmatprep.subr.mxu0 0.0
    %121 = vmatpush1.msra.mxu0 0.0
    %122 = vmatprep.subr.mxu0 0.0
    %123 = vmatpush1.msra.mxu0 0.0
    %124 = vmatprep.mubr.f32.mxu0 0.0
    %125 = vmatmul.mubr.f32.gmra.mrb[0].mxu0 %v58
    %v126 = vpop.f32.mrb[0].mxu0
    %v127 = vadd.f32 %v54, %v126
    %v128 = vpop.f32.mrb[0].mxu0
    %129 = vdwg.mxu0
    %vm130 = vcmask 130048
    %131 = vst.msk [vmem:[#allocation7] sm:$0xff] %vm130, %v127
    %133 = vrot.lane.b32.xlu0 %v127, 112
    %v134 = vpop.permute.xlu0 %133
    %136 = vst.msk [vmem:[#allocation8] sm:$0xff] %vm130, %v134
    // Predicated region
    $region22: #{tpu_custom_call.1} parent=1 // pred_check
      _
    $region23: #{tpu_custom_call.1} parent=1 // pred_check_branch
      %138 = sbr.rel (0) target = $region25
    $region24: #{tpu_custom_call.1} parent=1 // pred_region
      %s140 = ssub.s32 128, 128
      %141 = vsyncadd [#allocation4], %s140
      %s143 = sshll.u32 [#allocation7], 4
      %s144 = int_to_ptr.vmem [resolvable:$true] %s143
      %146 = dma.vmem_to_hbm [thread:$0]  %s144, 128, %s3, [#allocation4]
    $region25: #{tpu_custom_call.1} parent=1 // pred_fallthru
      _
    // Predicated region
    $region26: #{tpu_custom_call.1} parent=1 // pred_check
      _
    $region27: #{tpu_custom_call.1} parent=1 // pred_check_branch
      %148 = sbr.rel (0) target = $region29
    $region28: #{tpu_custom_call.1} parent=1 // pred_region
      %s150 = ssub.s32 128, 128
      %151 = vsyncadd [#allocation9], %s150
      %s153 = sshll.u32 [#allocation8], 4
      %s154 = int_to_ptr.vmem [resolvable:$true] %s153
      %156 = dma.vmem_to_hbm [thread:$0]  %s154, 128, %s4, [#allocation9]
    $region29: #{tpu_custom_call.1} parent=1 // pred_fallthru
      _
    // Predicated region
    $region30: #{tpu_custom_call.1} parent=1 // pred_check
      _
    $region31: #{tpu_custom_call.1} parent=1 // pred_check_branch
      %158 = sbr.rel (0) target = $region33
    $region32: #{tpu_custom_call.1} parent=1 // pred_region
      %159 = dma.done [#allocation4], 128
    $region33: #{tpu_custom_call.1} parent=1 // pred_fallthru
      _
    // Predicated region
    $region34: #{tpu_custom_call.1} parent=1 // pred_check
      _
    $region35: #{tpu_custom_call.1} parent=1 // pred_check_branch
      %161 = sbr.rel (0) target = $region37
    $region36: #{tpu_custom_call.1} parent=1 // pred_region
      %162 = dma.done [#allocation9], 128
    $region37: #{tpu_custom_call.1} parent=1 // pred_fallthru
      _
    %163 = vsyncpa [#allocation3], 1
    %164 = vsyncpa [#allocation6], 1
    %165 = vsyncpa [#allocation4], 1
    %166 = vsyncpa [#allocation9], 1

// kernel: tpu_custom_call.1
$region0: #{tpu_custom_call.1}
  #allocation0 [shape = 'u32[]', space=smem, size = 0x4, offset = 0x4, fixed_abs, tag = 'smem constant byte address 0x4 - core index']
  #allocation1 [shape = 'u32[144,128]{1,0:T(1,128)}', space=vmem, size = 0x12000, scoped, tag = 'internal scratch']
  %s0 = inlined_call_operand.hbm [shape: f32[8,32], index: 0, kind: input, shape index: {}]
  %s1 = inlined_call_operand.hbm [shape: f32[32,32], index: 1, kind: input, shape index: {}]
  %s2 = inlined_call_operand.vmem [shape: f32[1,32], index: 2, kind: input, shape index: {}]
  %s3 = inlined_call_operand.hbm [shape: f32[8,16], index: 3, kind: output, shape index: {0}]
  %s4 = inlined_call_operand.hbm [shape: f32[8,16], index: 4, kind: output, shape index: {1}]
  %5 = xla_tuple %s3, %s4
  %s6 = sld [smem:[#allocation0]]
  $region38: #{tpu_custom_call.1} parent=0
    _
  %s8 = ssub.s32 1, %s6
  %s9 = scalar_select 0, %s8, %s6
  $region1: #{tpu_custom_call.1} parent=0
    #allocation2 [shape = 'u8[4096]{0}', space=vmem, size = 0x1000, scoped, tag = 'input window, operand 0, single buffered']
    #allocation3 [shape = 's32[1]{0}', space=sflag, size = 0x4, scoped, tag = 'scoped memory for tpu_custom_call.1']
    #allocation4 [shape = 's32[1]{0}', space=sflag, size = 0x4, scoped, tag = 'scoped memory for tpu_custom_call.1']
    #allocation5 [shape = 'u8[16384]{0}', space=vmem, size = 0x4000, scoped, tag = 'input window, operand 1, single buffered']
    #allocation6 [shape = 's32[1]{0}', space=sflag, size = 0x4, scoped, tag = 'scoped memory for tpu_custom_call.1']
    #allocation7 [shape = 'u8[4096]{0}', space=vmem, size = 0x1000, scoped, tag = 'output window, operand 0, single buffered']
    #allocation8 [shape = 'u8[4096]{0}', space=vmem, size = 0x1000, scoped, tag = 'output window, operand 1, single buffered']
    #allocation9 [shape = 's32[1]{0}', space=sflag, size = 0x4, scoped, tag = 'scoped memory for tpu_custom_call.1']
    %10 = vsyncpa [#allocation3], 0
    %11 = vsyncpa [#allocation6], 0
    %12 = vsyncpa [#allocation4], 0
    %13 = vsyncpa [#allocation9], 0
    // Predicated region
    $region2: #{tpu_custom_call.1} parent=1 // pred_check
      _
    $region3: #{tpu_custom_call.1} parent=1 // pred_check_branch
      %15 = sbr.rel (0) target = $region5
    $region4: #{tpu_custom_call.1} parent=1 // pred_region
      %s17 = ssub.s32 128, 128
      %18 = vsyncadd [#allocation3], %s17
      %s20 = sshll.u32 [#allocation2], 4
      %s21 = int_to_ptr.vmem [resolvable:$true] %s20
      %23 = dma.hbm_to_vmem [thread:$0]  %s0, 128, %s21, [#allocation3]
    $region5: #{tpu_custom_call.1} parent=1 // pred_fallthru
      _
    // Predicated region
    $region6: #{tpu_custom_call.1} parent=1 // pred_check
      _
    $region7: #{tpu_custom_call.1} parent=1 // pred_check_branch
      %25 = sbr.rel (0) target = $region9
    $region8: #{tpu_custom_call.1} parent=1 // pred_region
      %s27 = ssub.s32 512, 512
      %28 = vsyncadd [#allocation6], %s27
      %s29 = sshll.u32 [#allocation5], 4
      %s30 = int_to_ptr.vmem [resolvable:$true] %s29
      %35 = dma.hbm_to_vmem [thread:$0]  %s1, 512, %s30, [#allocation6], 128, 128, 8
    $region9: #{tpu_custom_call.1} parent=1 // pred_fallthru
      _
    // Predicated region
    $region10: #{tpu_custom_call.1} parent=1 // pred_check
      _
    $region11: #{tpu_custom_call.1} parent=1 // pred_check_branch
      %37 = sbr.rel (0) target = $region13
    $region12: #{tpu_custom_call.1} parent=1 // pred_region
      _
    $region13: #{tpu_custom_call.1} parent=1 // pred_fallthru
      _
    // Predicated region
    $region14: #{tpu_custom_call.1} parent=1 // pred_check
      _
    $region15: #{tpu_custom_call.1} parent=1 // pred_check_branch
      %39 = sbr.rel (0) target = $region17
    $region16: #{tpu_custom_call.1} parent=1 // pred_region
      %40 = dma.done [#allocation3], 128
    $region17: #{tpu_custom_call.1} parent=1 // pred_fallthru
      _
    // Predicated region
    $region18: #{tpu_custom_call.1} parent=1 // pred_check
      _
    $region19: #{tpu_custom_call.1} parent=1 // pred_check_branch
      %42 = sbr.rel (0) target = $region21
    $region20: #{tpu_custom_call.1} parent=1 // pred_region
      %43 = dma.done [#allocation6], 512
    $region21: #{tpu_custom_call.1} parent=1 // pred_fallthru
      _
    %v44 = vld [vmem:[#allocation2] sm:$0xff]
    %v45 = vld [vmem:[#allocation5] sm:$0xff]
    %v46 = vld [vmem:[#allocation5 + $0x8] sm:$0xff]
    %v47 = vld [vmem:[#allocation5 + $0x10] sm:$0xff]
    %v48 = vld [vmem:[#allocation5 + $0x18] sm:$0xff]
    %v49 = vld [vmem:[%s2] sm:$0x1]
    %v51 = vlaneseq
    %v52 = vshrl.u32 %v51, 7
    %v53 = vsub.s32 0, %v52
    %v54 = vrot.slane %v49, %v53
    %vm56 = vcmask 261120
    %v58 = vsel %vm56, %v44, 0
    %60 = vmatprep.subr.mxu0 0.0
    %61 = vmatpush1.msra.mxu0 %v45
    %62 = vmatprep.subr.mxu0 0.0
    %63 = vmatpush1.msra.mxu0 %v46
    %64 = vmatprep.subr.mxu0 0.0
    %65 = vmatpush1.msra.mxu0 %v47
    %66 = vmatprep.subr.mxu0 0.0
    %67 = vmatpush1.msra.mxu0 %v48
    %68 = vmatprep.subr.mxu0 0.0
    %69 = vmatpush1.msra.mxu0 0.0
    %70 = vmatprep.subr.mxu0 0.0
    %71 = vmatpush1.msra.mxu0 0.0
    %72 = vmatprep.subr.mxu0 0.0
    %73 = vmatpush1.msra.mxu0 0.0
    %74 = vmatprep.subr.mxu0 0.0
    %75 = vmatpush1.msra.mxu0 0.0
    %76 = vmatprep.subr.mxu0 0.0
    %77 = vmatpush1.msra.mxu0 0.0
    %78 = vmatprep.subr.mxu0 0.0
    %79 = vmatpush1.msra.mxu0 0.0
    %80 = vmatprep.subr.mxu0 0.0
    %81 = vmatpush1.msra.mxu0 0.0
    %82 = vmatprep.subr.mxu0 0.0
    %83 = vmatpush1.msra.mxu0 0.0
    %84 = vmatprep.subr.mxu0 0.0
    %85 = vmatpush1.msra.mxu0 0.0
    %86 = vmatprep.subr.mxu0 0.0
    %87 = vmatpush1.msra.mxu0 0.0
    %88 = vmatprep.subr.mxu0 0.0
    %89 = vmatpush1.msra.mxu0 0.0
    %90 = vmatprep.subr.mxu0 0.0
    %91 = vmatpush1.msra.mxu0 0.0
    %92 = vmatprep.subr.mxu0 0.0
    %93 = vmatpush1.msra.mxu0 0.0
    %94 = vmatprep.subr.mxu0 0.0
    %95 = vmatpush1.msra.mxu0 0.0
    %96 = vmatprep.subr.mxu0 0.0
    %97 = vmatpush1.msra.mxu0 0.0
    %98 = vmatprep.subr.mxu0 0.0
    %99 = vmatpush1.msra.mxu0 0.0
    %100 = vmatprep.subr.mxu0 0.0
    %101 = vmatpush1.msra.mxu0 0.0
    %102 = vmatprep.subr.mxu0 0.0
    %103 = vmatpush1.msra.mxu0 0.0
    %104 = vmatprep.subr.mxu0 0.0
    %105 = vmatpush1.msra.mxu0 0.0
    %106 = vmatprep.subr.mxu0 0.0
    %107 = vmatpush1.msra.mxu0 0.0
    %108 = vmatprep.subr.mxu0 0.0
    %109 = vmatpush1.msra.mxu0 0.0
    %110 = vmatprep.subr.mxu0 0.0
    %111 = vmatpush1.msra.mxu0 0.0
    %112 = vmatprep.subr.mxu0 0.0
    %113 = vmatpush1.msra.mxu0 0.0
    %114 = vmatprep.subr.mxu0 0.0
    %115 = vmatpush1.msra.mxu0 0.0
    %116 = vmatprep.subr.mxu0 0.0
    %117 = vmatpush1.msra.mxu0 0.0
    %118 = vmatprep.subr.mxu0 0.0
    %119 = vmatpush1.msra.mxu0 0.0
    %120 = vmatprep.subr.mxu0 0.0
    %121 = vmatpush1.msra.mxu0 0.0
    %122 = vmatprep.subr.mxu0 0.0
    %123 = vmatpush1.msra.mxu0 0.0
    %124 = vmatprep.mubr.f32.mxu0 0.0
    %125 = vmatmul.mubr.f32.gmra.mrb[0].mxu0 %v58
    %v126 = vpop.f32.mrb[0].mxu0
    %v127 = vadd.f32 %v54, %v126
    %v128 = vpop.f32.mrb[0].mxu0
    %129 = vdwg.mxu0
    %vm130 = vcmask 130048
    %131 = vst.msk [vmem:[#allocation7] sm:$0xff] %vm130, %v127
    %133 = vrot.lane.b32.xlu0 %v127, 112
    %v134 = vpop.permute.xlu0 %133
    %136 = vst.msk [vmem:[#allocation8] sm:$0xff] %vm130, %v134
    // Predicated region
    $region22: #{tpu_custom_call.1} parent=1 // pred_check
      _
    $region23: #{tpu_custom_call.1} parent=1 // pred_check_branch
      %138 = sbr.rel (0) target = $region25
    $region24: #{tpu_custom_call.1} parent=1 // pred_region
      %s140 = ssub.s32 128, 128
      %141 = vsyncadd [#allocation4], %s140
      %s143 = sshll.u32 [#allocation7], 4
      %s144 = int_to_ptr.vmem [resolvable:$true] %s143
      %146 = dma.vmem_to_hbm [thread:$0]  %s144, 128, %s3, [#allocation4]
    $region25: #{tpu_custom_call.1} parent=1 // pred_fallthru
      _
    // Predicated region
    $region26: #{tpu_custom_call.1} parent=1 // pred_check
      _
    $region27: #{tpu_custom_call.1} parent=1 // pred_check_branch
      %148 = sbr.rel (0) target = $region29
    $region28: #{tpu_custom_call.1} parent=1 // pred_region
      %s150 = ssub.s32 128, 128
      %151 = vsyncadd [#allocation9], %s150
      %s153 = sshll.u32 [#allocation8], 4
      %s154 = int_to_ptr.vmem [resolvable:$true] %s153
      %156 = dma.vmem_to_hbm [thread:$0]  %s154, 128, %s4, [#allocation9]
    $region29: #{tpu_custom_call.1} parent=1 // pred_fallthru
      _
    // Predicated region
    $region30: #{tpu_custom_call.1} parent=1 // pred_check
      _
    $region31: #{tpu_custom_call.1} parent=1 // pred_check_branch
      %158 = sbr.rel (0) target = $region33
    $region32: #{tpu_custom_call.1} parent=1 // pred_region
      %159 = dma.done [#allocation4], 128
    $region33: #{tpu_custom_call.1} parent=1 // pred_fallthru
      _
    // Predicated region
    $region34: #{tpu_custom_call.1} parent=1 // pred_check
      _
    $region35: #{tpu_custom_call.1} parent=1 // pred_check_branch
      %161 = sbr.rel (0) target = $region37
    $region36: #{tpu_custom_call.1} parent=1 // pred_region
      %162 = dma.done [#allocation9], 128
    $region37: #{tpu_custom_call.1} parent=1 // pred_fallthru
      _
    %163 = vsyncpa [#allocation3], 1
    %164 = vsyncpa [#allocation6], 1
    %165 = vsyncpa [#allocation4], 1
    %166 = vsyncpa [#allocation9], 1

</llo_original>
